<compile_context>
chip_gen: v7x
topology: tpu7x:2x2x1
jax: 0.10.0
libtpu: 0.0.40
codegen_flags: <defaults>
</compile_context>

<pallas_src>
import jax
import jax.numpy as jnp
from jax.experimental import pallas as pl
from jax.experimental.pallas import tpu as pltpu


def _round_up(v, m):
    return ((v + m - 1) // m) * m


def _linreg_kernel(b_ref, x_ref, w_ref, o_ref):
    # x_ref: (TN, D) VMEM tile; w_ref: (1, D) lane-major VMEM (broadcast over rows);
    # b_ref: (1, 1) SMEM scalar; o_ref: (TN, 1) VMEM tile (ragged last block is masked
    # on writeback by Pallas, garbage rows past N never reach HBM).
    tn, d = x_ref.shape
    acc = jnp.zeros((tn, 1), jnp.float32)
    # Accumulate over 128-lane chunks of D (static Python loop, D=384 -> 3 chunks) so
    # the mul feeds the XLU lane-reduce chunk-by-chunk and vreg pressure stays bounded.
    for start in range(0, d, 128):
        size = min(128, d - start)
        xs = x_ref[:, start:start + size]
        ws = w_ref[:, start:start + size]
        acc = acc + jnp.sum(xs * ws, axis=1, keepdims=True)   # VPU mul + XLU reduce
    o_ref[...] = (acc + b_ref[0, 0]).astype(o_ref.dtype)


def simple_linear_regression(x, weight, bias, *, block_rows=2048):
    """Forward pass of SimpleLinearRegression: (x @ weight.T + bias).view(-1).

    x:      (N, D) float32
    weight: (1, D) float32  (PyTorch nn.Linear weight layout, kept lane-major)
    bias:   (1,)   float32
    returns (N,)   float32
    """
    N, D = x.shape
    x = x.astype(jnp.float32)
    w = jnp.asarray(weight, jnp.float32).reshape(1, D)     # (1, D): 1 sublane x D lanes
    b = jnp.asarray(bias, jnp.float32).reshape(1, 1)       # scalar, lives in SMEM

    # Row tile: large (default 2048) to amortize per-grid-step overhead; for modest N,
    # clamp to ceil(N/2) rounded up to 8 sublanes so the grid has >= 2 steps and both
    # v7x TensorCores get work.  Always a multiple of 8 (block-shape sublane granule).
    tn = max(8, min(block_rows, _round_up(pl.cdiv(N, 2), 8)))
    grid = (pl.cdiv(N, tn),)

    cost = pl.CostEstimate(
        flops=2 * N * D,
        transcendentals=0,
        bytes_accessed=N * D * 4 + N * 4 + D * 4 + 4,
    )

    out = pl.pallas_call(
        _linreg_kernel,
        out_shape=jax.ShapeDtypeStruct((N, 1), jnp.float32),
        grid=grid,
        in_specs=[
            pl.BlockSpec((1, 1), lambda i: (0, 0),
                         memory_space=pltpu.SMEM),          # bias scalar
            pl.BlockSpec((tn, D), lambda i: (i, 0)),         # x row tile (ragged last)
            pl.BlockSpec((1, D), lambda i: (0, 0)),          # weight, lane-major
        ],
        out_specs=pl.BlockSpec((tn, 1), lambda i: (i, 0)),
        compiler_params=pltpu.CompilerParams(
            dimension_semantics=("parallel",)),              # 2-TC sharding on v7x
        cost_estimate=cost,
    )(b, x, w)
    return out.reshape(-1)


if __name__ == "__main__":
    input_dim = 384
    key = jax.random.PRNGKey(0)
    kx, kw, kb = jax.random.split(key, 3)

    # Deterministic synthetic parameters matching nn.Linear(384, 1) shapes.
    weight = jax.random.normal(kw, (1, input_dim), dtype=jnp.float32) * 0.05
    bias = jax.random.normal(kb, (1,), dtype=jnp.float32) * 0.05

    def ref_fn(xv):
        return (xv @ weight.T + bias).reshape(-1)

    # Small batch: single 8-row tile.
    x_small = jax.random.normal(kx, (8, input_dim), dtype=jnp.float32)
    y_small = jax.block_until_ready(simple_linear_regression(x_small, weight, bias))
    assert y_small.shape == (8,)
    assert jnp.allclose(y_small, ref_fn(x_small), atol=1e-5, rtol=1e-5)

    # Non-multiple batch: two ~520-row blocks (both TCs), ragged final block, no pad copy.
    x_mid = jax.random.normal(kx, (1037, input_dim), dtype=jnp.float32)
    y_mid = jax.block_until_ready(simple_linear_regression(x_mid, weight, bias))
    assert y_mid.shape == (1037,)
    assert jnp.allclose(y_mid, ref_fn(x_mid), atol=1e-5, rtol=1e-5)

    # Larger batch: exercises the 2048-row tile cap plus a ragged final block.
    x_big = jax.random.normal(kx, (5000, input_dim), dtype=jnp.float32)
    y_big = jax.block_until_ready(simple_linear_regression(x_big, weight, bias))
    assert y_big.shape == (5000,)
    assert jnp.allclose(y_big, ref_fn(x_big), atol=1e-5, rtol=1e-5)

    print("KERNEL_OK")
</pallas_src>

<mosaic_0001>
module attributes {stable_mosaic.version = 11 : i64} {
  func.func @_linreg_kernel(%arg0: i32, %arg1: memref<1x1xf32, #tpu.memory_space<smem>>, %arg2: memref<8x384xf32, #tpu.memory_space<vmem>>, %arg3: memref<1x384xf32, #tpu.memory_space<vmem>>, %arg4: memref<8x1xf32, #tpu.memory_space<vmem>>) attributes {dimension_semantics = [#tpu.dimension_semantics<parallel>], iteration_bounds = array<i64: 1>, scalar_prefetch = 0 : i64, scratch_operands = 0 : i64, tpu.core_type = #tpu.core_type<tc>, window_params = [{transform_indices = @transform_0, window_bounds = array<i64: 1, 1>}, {transform_indices = @transform_1, window_bounds = array<i64: 8, 384>}, {pipeline_mode = #tpu.pipeline_mode<synchronous>, transform_indices = @transform_2, window_bounds = array<i64: 1, 384>}, {transform_indices = @transform_3, window_bounds = array<i64: 8, 1>}]} {
    %cst = arith.constant 0.000000e+00 : f32
    %0 = vector.broadcast %cst : f32 to vector<8x1xf32>
    %c0 = arith.constant 0 : index
    %c0_0 = arith.constant 0 : index
    %1 = vector.load %arg2[%c0, %c0_0] : memref<8x384xf32, #tpu.memory_space<vmem>>, vector<8x128xf32>
    %c0_1 = arith.constant 0 : index
    %c0_2 = arith.constant 0 : index
    %2 = vector.load %arg3[%c0_1, %c0_2] : memref<1x384xf32, #tpu.memory_space<vmem>>, vector<1x128xf32>
    %3 = vector.broadcast %2 : vector<1x128xf32> to vector<8x128xf32>
    %4 = arith.mulf %1, %3 : vector<8x128xf32>
    %cst_3 = arith.constant dense<0.000000e+00> : vector<8xf32>
    %5 = vector.multi_reduction <add>, %4, %cst_3 [1] : vector<8x128xf32> to vector<8xf32>
    %6 = vector.shape_cast %5 : vector<8xf32> to vector<8x1xf32>
    %7 = arith.addf %0, %6 : vector<8x1xf32>
    %c0_4 = arith.constant 0 : index
    %c128 = arith.constant 128 : index
    %8 = vector.load %arg2[%c0_4, %c128] : memref<8x384xf32, #tpu.memory_space<vmem>>, vector<8x128xf32>
    %c0_5 = arith.constant 0 : index
    %c128_6 = arith.constant 128 : index
    %9 = vector.load %arg3[%c0_5, %c128_6] : memref<1x384xf32, #tpu.memory_space<vmem>>, vector<1x128xf32>
    %10 = vector.broadcast %9 : vector<1x128xf32> to vector<8x128xf32>
    %11 = arith.mulf %8, %10 : vector<8x128xf32>
    %cst_7 = arith.constant dense<0.000000e+00> : vector<8xf32>
    %12 = vector.multi_reduction <add>, %11, %cst_7 [1] : vector<8x128xf32> to vector<8xf32>
    %13 = vector.shape_cast %12 : vector<8xf32> to vector<8x1xf32>
    %14 = arith.addf %7, %13 : vector<8x1xf32>
    %c0_8 = arith.constant 0 : index
    %c256 = arith.constant 256 : index
    %15 = vector.load %arg2[%c0_8, %c256] : memref<8x384xf32, #tpu.memory_space<vmem>>, vector<8x128xf32>
    %c0_9 = arith.constant 0 : index
    %c256_10 = arith.constant 256 : index
    %16 = vector.load %arg3[%c0_9, %c256_10] : memref<1x384xf32, #tpu.memory_space<vmem>>, vector<1x128xf32>
    %17 = vector.broadcast %16 : vector<1x128xf32> to vector<8x128xf32>
    %18 = arith.mulf %15, %17 : vector<8x128xf32>
    %cst_11 = arith.constant dense<0.000000e+00> : vector<8xf32>
    %19 = vector.multi_reduction <add>, %18, %cst_11 [1] : vector<8x128xf32> to vector<8xf32>
    %20 = vector.shape_cast %19 : vector<8xf32> to vector<8x1xf32>
    %21 = arith.addf %14, %20 : vector<8x1xf32>
    %c0_12 = arith.constant 0 : index
    %c0_13 = arith.constant 0 : index
    %22 = memref.load %arg1[%c0_12, %c0_13] : memref<1x1xf32, #tpu.memory_space<smem>>
    %23 = vector.broadcast %22 : f32 to vector<8x1xf32>
    %24 = arith.addf %21, %23 : vector<8x1xf32>
    %c0_14 = arith.constant 0 : index
    %c0_15 = arith.constant 0 : index
    %25 = vector.load %arg4[%c0_14, %c0_15] : memref<8x1xf32, #tpu.memory_space<vmem>>, vector<8x1xf32>
    tpu.vector_store %arg4[%c0_14, %c0_15], %24 {strides = array<i32>} : memref<8x1xf32, #tpu.memory_space<vmem>>, vector<8x1xf32>,
    return
  }
  func.func @transform_0(%arg0: i32) -> (i32, i32) {
    %c0_i32 = arith.constant 0 : i32
    %c0_i32_0 = arith.constant 0 : i32
    %c0_i32_1 = arith.constant 0 : i32
    return %c0_i32, %c0_i32_0 : i32, i32
  }
  func.func @transform_1(%arg0: i32) -> (i32, i32) {
    %c0_i32 = arith.constant 0 : i32
    %c0_i32_0 = arith.constant 0 : i32
    return %arg0, %c0_i32 : i32, i32
  }
  func.func @transform_2(%arg0: i32) -> (i32, i32) {
    %c0_i32 = arith.constant 0 : i32
    %c0_i32_0 = arith.constant 0 : i32
    %c0_i32_1 = arith.constant 0 : i32
    return %c0_i32, %c0_i32_0 : i32, i32
  }
  func.func @transform_3(%arg0: i32) -> (i32, i32) {
    %c0_i32 = arith.constant 0 : i32
    %c0_i32_0 = arith.constant 0 : i32
    return %arg0, %c0_i32 : i32, i32
  }
}

</mosaic_0001>

<llo_original>
// kernel: tpu_custom_call.1
$region0: #{tpu_custom_call.1}
  #allocation0 [shape = 'u32[]', space=smem, size = 0x4, offset = 0x4, fixed_abs, tag = 'smem constant byte address 0x4 - core index']
  #allocation1 [shape = 'u32[144,128]{1,0:T(1,128)}', space=vmem, size = 0x12000, scoped, tag = 'internal scratch']
  #allocation2 [shape = 'f32[1,1]{1,0:T(1,128)S(6)}', space=smem, size = 0x200, scoped, tag = 'scoped memory for tpu_custom_call.1']
  %s0 = inlined_call_operand.<no memory space> [shape: f32[1,1], index: 0, kind: input, shape index: {}]
  %s1 = inlined_call_operand.hbm [shape: f32[8,384], index: 1, kind: input, shape index: {}]
  %s2 = inlined_call_operand.vmem [shape: f32[1,384], index: 2, kind: input, shape index: {}]
  %s3 = inlined_call_operand.vmem [shape: f32[8,1], index: 3, kind: output, shape index: {}]
  %s4 = sld [smem:[#allocation0]]
  $region26: #{tpu_custom_call.1} parent=0
    _
  %s6 = ssub.s32 1, %s4
  %s7 = scalar_select 0, %s6, %s4
  %8 = sst [smem:[#allocation2]] %s0
  $region1: #{tpu_custom_call.1} parent=0
    #allocation3 [shape = 'u8[12288]{0}', space=vmem, size = 0x3000, scoped, tag = 'input window, operand 1, single buffered']
    #allocation4 [shape = 's32[1]{0}', space=sflag, size = 0x4, scoped, tag = 'scoped memory for tpu_custom_call.1']
    %9 = vsyncpa [#allocation4], 0
    // Predicated region
    $region2: #{tpu_custom_call.1} parent=1 // pred_check
      _
    $region3: #{tpu_custom_call.1} parent=1 // pred_check_branch
      %11 = sbr.rel (0) target = $region5
    $region4: #{tpu_custom_call.1} parent=1 // pred_region
      _
    $region5: #{tpu_custom_call.1} parent=1 // pred_fallthru
      _
    // Predicated region
    $region6: #{tpu_custom_call.1} parent=1 // pred_check
      _
    $region7: #{tpu_custom_call.1} parent=1 // pred_check_branch
      %13 = sbr.rel (0) target = $region9
    $region8: #{tpu_custom_call.1} parent=1 // pred_region
      %s15 = ssub.s32 384, 384
      %16 = vsyncadd [#allocation4], %s15
      %s18 = sshll.u32 [#allocation3], 4
      %s19 = int_to_ptr.vmem [resolvable:$true] %s18
      %21 = dma.hbm_to_vmem [thread:$0]  %s1, 384, %s19, [#allocation4]
    $region9: #{tpu_custom_call.1} parent=1 // pred_fallthru
      _
    // Predicated region
    $region10: #{tpu_custom_call.1} parent=1 // pred_check
      _
    $region11: #{tpu_custom_call.1} parent=1 // pred_check_branch
      %23 = sbr.rel (0) target = $region13
    $region12: #{tpu_custom_call.1} parent=1 // pred_region
      _
    $region13: #{tpu_custom_call.1} parent=1 // pred_fallthru
      _
    // Predicated region
    $region14: #{tpu_custom_call.1} parent=1 // pred_check
      _
    $region15: #{tpu_custom_call.1} parent=1 // pred_check_branch
      %25 = sbr.rel (0) target = $region17
    $region16: #{tpu_custom_call.1} parent=1 // pred_region
      %26 = dma.done [#allocation4], 384
    $region17: #{tpu_custom_call.1} parent=1 // pred_fallthru
      _
    %v27 = vld [vmem:[#allocation3] sm:$0xff]
    %v28 = vld [vmem:[%s2] sm:$0x1]
    %v30 = vlaneseq
    %v31 = vshrl.u32 %v30, 7
    %v32 = vsub.s32 0, %v31
    %v33 = vrot.slane %v28, %v32
    %v35 = vmul.f32 %v27, %v33
    %36 = vadd.xlane.f32.xlu0 %v35
    %v37 = vpop.xlane.xlu0 %36
    %v38 = vadd.f32 %v37, 0.0
    %v39 = vld [vmem:[#allocation3 + $0x8] sm:$0xff]
    %v40 = vld [vmem:[%s2 + $0x1] sm:$0x1]
    %v42 = vlaneseq
    %v43 = vshrl.u32 %v42, 7
    %v44 = vsub.s32 0, %v43
    %v45 = vrot.slane %v40, %v44
    %v47 = vmul.f32 %v39, %v45
    %48 = vadd.xlane.f32.xlu0 %v47
    %v49 = vpop.xlane.xlu0 %48
    %v50 = vadd.f32 %v38, %v49
    %v51 = vld [vmem:[#allocation3 + $0x10] sm:$0xff]
    %v52 = vld [vmem:[%s2 + $0x2] sm:$0x1]
    %v54 = vlaneseq
    %v55 = vshrl.u32 %v54, 7
    %v56 = vsub.s32 0, %v55
    %v57 = vrot.slane %v52, %v56
    %v59 = vmul.f32 %v51, %v57
    %60 = vadd.xlane.f32.xlu0 %v59
    %v61 = vpop.xlane.xlu0 %60
    %v62 = vadd.f32 %v50, %v61
    %s63 = sld [smem:[#allocation2]]
    %v64 = vstv %s63
    %v65 = vadd.f32 %v62, %v64
    %vm66 = vcmask 7168
    %67 = vst.msk [vmem:[%s3] sm:$0xff] %vm66, %v65
    // Predicated region
    $region18: #{tpu_custom_call.1} parent=1 // pred_check
      _
    $region19: #{tpu_custom_call.1} parent=1 // pred_check_branch
      %69 = sbr.rel (0) target = $region21
    $region20: #{tpu_custom_call.1} parent=1 // pred_region
      _
    $region21: #{tpu_custom_call.1} parent=1 // pred_fallthru
      _
    // Predicated region
    $region22: #{tpu_custom_call.1} parent=1 // pred_check
      _
    $region23: #{tpu_custom_call.1} parent=1 // pred_check_branch
      %71 = sbr.rel (0) target = $region25
    $region24: #{tpu_custom_call.1} parent=1 // pred_region
      _
    $region25: #{tpu_custom_call.1} parent=1 // pred_fallthru
      _
    %72 = vsyncpa [#allocation4], 1

</llo_original>
